<compile_context>
chip_gen: v6e
topology: v6e:2x2x1
jax: 0.10.0
libtpu: 0.0.40
codegen_flags: <defaults>
</compile_context>

<pallas_src>
import jax
import jax.numpy as jnp
from jax.experimental import pallas as pl
from jax.experimental.pallas import tpu as pltpu

_LANE = 128
_SMALL_BYPASS_BYTES = 256 * 1024   # below this, fused XLA add is already at roofline


# ----------------------------------------------------------------------------
# Pallas kernel (exec_forward, non-mock hw-data injection path)
# ----------------------------------------------------------------------------
def _inject_kernel(x_ref, hw_ref, o_ref):
    # hardware observables injected into the functional output
    # (modelled as an elementwise combination on the VPU)
    o_ref[...] = x_ref[...] + hw_ref[...]


def _sublane_multiple(itemsize: int) -> int:
    # Sub-32-bit dtypes pack along sublanes: f32 -> 8, bf16 -> 16, int8/fp8 -> 32.
    return 8 * max(1, 4 // itemsize)


def _tpu_block_budget():
    """Returns (max per-operand block bytes, TensorCores worth sharding over)."""
    try:
        kind = jax.devices()[0].device_kind.lower()
    except Exception:  # pragma: no cover - defensive
        kind = ""
    if "v7" in kind:
        # 3 operands x 2 buffers x 4 MiB = 24 MiB < 32 MiB scoped default,
        # well under the 64 MiB physical per-TC VMEM.  2 TCs per chip.
        return 4 * 1024 * 1024, 2
    if "v6" in kind:
        return 4 * 1024 * 1024, 1
    # v5e (16 MiB scoped default) and unknown chips: stay conservative
    # (3 x 2 x 2 MiB = 12 MiB).
    return 2 * 1024 * 1024, 1


def _pallas_inject(x, hw_data):
    """exec_forward non-mock data path as a tiled, bandwidth-bound kernel."""
    if hw_data.shape != x.shape:
        raise ValueError(
            f"hw_data shape {hw_data.shape} must match input shape {x.shape}")

    # Match `x + hw_data` promotion semantics (no silent downcast of the
    # hardware observables when x is a low-precision dtype).
    out_dtype = jnp.result_type(x.dtype, hw_data.dtype)
    x = x.astype(out_dtype)
    hw_data = hw_data.astype(out_dtype)

    n = x.size
    itemsize = jnp.dtype(out_dtype).itemsize
    sublane = _sublane_multiple(itemsize)

    # Small tensors: a pallas_call launch + one grid step of fixed overhead
    # would dominate a roofline-level fused XLA add.  Ragged sizes: wrapper
    # pad/slice copies would move 2-3x the necessary HBM bytes, so the fused
    # XLA add is strictly better there too.
    if (n * itemsize < _SMALL_BYPASS_BYTES
            or n % (sublane * _LANE) != 0
            or itemsize > 4):
        # TODO(synk): handle the ragged tail with a masked final block inside
        # the kernel instead of falling back to XLA, if it ever matters.
        return x + hw_data

    rows = n // _LANE                       # metadata-only reshape target
    block_bytes, cores = _tpu_block_budget()
    block_rows = max(sublane,
                     (block_bytes // (_LANE * itemsize)) // sublane * sublane)
    block_rows = min(block_rows, rows)
    # On multi-TC chips make sure the grid has >=2 steps so
    # dimension_semantics=("parallel",) can actually shard across cores.
    if cores > 1 and pl.cdiv(rows, block_rows) < cores and rows >= cores * sublane:
        block_rows = -(-pl.cdiv(rows, cores) // sublane) * sublane
    grid = (pl.cdiv(rows, block_rows),)

    x_slab = x.reshape(rows, _LANE)         # no pad: n % (sublane*128) == 0
    hw_slab = hw_data.reshape(rows, _LANE)
    spec = pl.BlockSpec((block_rows, _LANE), lambda i: (i, 0))

    out_slab = pl.pallas_call(
        _inject_kernel,
        out_shape=jax.ShapeDtypeStruct((rows, _LANE), out_dtype),
        grid=grid,
        in_specs=[spec, spec],
        out_specs=spec,
        compiler_params=pltpu.CompilerParams(
            # independent grid axis -> shards across the 2 TensorCores on
            # v7x; harmless on single-TC v5e/v6e.
            dimension_semantics=("parallel",),
            # 3 operands x 2 pipeline buffers + headroom; keeps the larger
            # blocks legal even where the scoped-VMEM default is 16 MiB.
            vmem_limit_bytes=min(
                6 * block_rows * _LANE * itemsize + (4 << 20), 64 << 20)),
        cost_estimate=pl.CostEstimate(
            flops=n, transcendentals=0,
            bytes_accessed=3 * n * itemsize),
    )(x_slab, hw_slab)

    return out_slab.reshape(x.shape)


# ----------------------------------------------------------------------------
# Minimal JAX-side re-implementation of the experiment-graph plumbing
# (TensorHandle / Experiment / HXBaseExperimentModule semantics).
# ----------------------------------------------------------------------------
class TensorHandle:
    def __init__(self):
        self.observable_state = None

    def put(self, *data):
        self.observable_state = data[0] if len(data) == 1 else data


class Experiment:
    """Registers (module, inputs, output) triples; `run` executes them."""

    def __init__(self, mock: bool = True):
        self.mock = mock
        self._connections = []

    def connect(self, module, inputs, output):
        self._connections.append((module, inputs, output))

    def run(self, hw_map=None):
        hw_map = hw_map or {}
        for module, inputs, output in self._connections:
            module.exec_forward(inputs, output, hw_map)

    def __repr__(self):
        return f"Experiment(mock={self.mock})"


class HXBaseExperimentModule:
    """JAX/Pallas port of hxtorch.spiking.modules.HXBaseExperimentModule."""

    output_type = TensorHandle
    descriptor = None

    def __init__(self, experiment: Experiment) -> None:
        self.experiment = experiment
        self._output_handle = self.output_type()

    def extra_repr(self) -> str:
        return f"experiment={self.experiment}"

    @property
    def func(self):
        # TODO(synk): `func` is abstract in the PyTorch base class; default
        # semantics here are the exec_forward data path: pure pass-through in
        # mock mode (no kernel, no HBM round trip) and hw-data injection
        # (Pallas elementwise kernel) in non-mock mode.
        def _fn(inputs, hw_data=None):
            (x,) = inputs
            if hw_data is None:
                return x                    # mock: identity, free
            return _pallas_inject(x, hw_data)
        return _fn

    def forward(self, *inputs):
        # forward() only registers the op with the experiment graph and
        # returns the (still-empty) output handle, exactly like the original.
        self.experiment.connect(self, inputs, self._output_handle)
        return self._output_handle

    __call__ = forward

    def exec_forward(self, input, output, hw_map):
        hw_data = hw_map.get(self.descriptor)
        if not isinstance(input, tuple):
            input = (input,)
        input = tuple(handle.observable_state for handle in input)
        out = self.func(input, hw_data=hw_data)
        out = (out,) if not isinstance(out, tuple) else out
        output.put(*out)


# ----------------------------------------------------------------------------
# Driver
# ----------------------------------------------------------------------------
if __name__ == "__main__":
    key = jax.random.PRNGKey(0)
    k1, k2, k3, k4, k5, k6 = jax.random.split(key, 6)

    # ---- mock path: forward() registers, run() executes (pass-through) ----
    x = jax.random.normal(k1, (2, 4, 16, 16), dtype=jnp.float32)   # NCHW
    experiment = Experiment(mock=True)
    module = HXBaseExperimentModule(experiment)
    in_handle = TensorHandle()
    in_handle.put(x)
    out_handle = module(in_handle)
    experiment.run(hw_map={})
    result = jax.block_until_ready(out_handle.observable_state)
    assert result.shape == x.shape and result.dtype == x.dtype
    assert bool(jnp.allclose(result, x)), "pass-through semantics violated"

    # ---- non-mock path: hw-observable injection (small -> XLA bypass) ----
    hw = jax.random.normal(k2, x.shape, dtype=jnp.float32)
    experiment2 = Experiment(mock=False)
    module2 = HXBaseExperimentModule(experiment2)
    in_handle2 = TensorHandle()
    in_handle2.put(x)
    out_handle2 = module2(in_handle2)
    experiment2.run(hw_map={None: hw})      # descriptor is None on the base
    result2 = jax.block_until_ready(out_handle2.observable_state)
    assert result2.shape == x.shape
    assert bool(jnp.allclose(result2, x + hw, atol=1e-6))

    # ---- Pallas kernel path: large, lane/sublane-aligned tensor (1 MiB) ----
    xb = jax.random.normal(k3, (16, 16, 32, 32), dtype=jnp.float32)
    hwb = jax.random.normal(k4, xb.shape, dtype=jnp.float32)
    outb = jax.block_until_ready(_pallas_inject(xb, hwb))
    assert outb.shape == xb.shape and outb.dtype == xb.dtype
    assert bool(jnp.allclose(outb, xb + hwb, atol=1e-6))

    # ---- ragged-size sanity check (falls back to the fused XLA add) ----
    xr = jax.random.normal(k5, (2, 3, 5, 7), jnp.float32)
    hwr = jax.random.normal(k6, xr.shape, jnp.float32)
    outr = jax.block_until_ready(_pallas_inject(xr, hwr))
    assert outr.shape == xr.shape
    assert bool(jnp.allclose(outr, xr + hwr, atol=1e-6))

    print("KERNEL_OK")
</pallas_src>

<mosaic_0001>
module attributes {stable_mosaic.version = 11 : i64} {
  func.func @_inject_kernel(%arg0: i32, %arg1: memref<2048x128xf32, #tpu.memory_space<vmem>>, %arg2: memref<2048x128xf32, #tpu.memory_space<vmem>>, %arg3: memref<2048x128xf32, #tpu.memory_space<vmem>>) attributes {dimension_semantics = [#tpu.dimension_semantics<parallel>], iteration_bounds = array<i64: 1>, scalar_prefetch = 0 : i64, scratch_operands = 0 : i64, tpu.core_type = #tpu.core_type<tc>, window_params = [{transform_indices = @transform_0, window_bounds = array<i64: 2048, 128>}, {transform_indices = @transform_1, window_bounds = array<i64: 2048, 128>}, {transform_indices = @transform_2, window_bounds = array<i64: 2048, 128>}]} {
    %c0 = arith.constant 0 : index
    %c0_0 = arith.constant 0 : index
    %0 = vector.load %arg1[%c0, %c0_0] : memref<2048x128xf32, #tpu.memory_space<vmem>>, vector<2048x128xf32>
    %c0_1 = arith.constant 0 : index
    %c0_2 = arith.constant 0 : index
    %1 = vector.load %arg2[%c0_1, %c0_2] : memref<2048x128xf32, #tpu.memory_space<vmem>>, vector<2048x128xf32>
    %2 = arith.addf %0, %1 : vector<2048x128xf32>
    %c0_3 = arith.constant 0 : index
    %c0_4 = arith.constant 0 : index
    %3 = vector.load %arg3[%c0_3, %c0_4] : memref<2048x128xf32, #tpu.memory_space<vmem>>, vector<2048x128xf32>
    tpu.vector_store %arg3[%c0_3, %c0_4], %2 {strides = array<i32>} : memref<2048x128xf32, #tpu.memory_space<vmem>>, vector<2048x128xf32>,
    return
  }
  func.func @transform_0(%arg0: i32) -> (i32, i32) {
    %c0_i32 = arith.constant 0 : i32
    %c0_i32_0 = arith.constant 0 : i32
    return %arg0, %c0_i32 : i32, i32
  }
  func.func @transform_1(%arg0: i32) -> (i32, i32) {
    %c0_i32 = arith.constant 0 : i32
    %c0_i32_0 = arith.constant 0 : i32
    return %arg0, %c0_i32 : i32, i32
  }
  func.func @transform_2(%arg0: i32) -> (i32, i32) {
    %c0_i32 = arith.constant 0 : i32
    %c0_i32_0 = arith.constant 0 : i32
    return %arg0, %c0_i32 : i32, i32
  }
}

</mosaic_0001>

<llo_original>
// kernel: tpu_custom_call.1
$region0: #{tpu_custom_call.1}
  #allocation0 [shape = 'u32[]', space=smem, size = 0x4, offset = 0x4, fixed_abs, tag = 'smem constant byte address 0x4 - core index']
  #allocation1 [shape = 'u32[144,128]{1,0:T(1,128)}', space=vmem, size = 0x12000, scoped, tag = 'internal scratch']
  %s0 = inlined_call_operand.hbm [shape: f32[2048,128], index: 0, kind: input, shape index: {}]
  %s1 = inlined_call_operand.hbm [shape: f32[2048,128], index: 1, kind: input, shape index: {}]
  %s2 = inlined_call_operand.hbm [shape: f32[2048,128], index: 2, kind: output, shape index: {}]
  %s3 = sld [smem:[#allocation0]]
  $region26: #{tpu_custom_call.1} parent=0
    _
  %s5 = ssub.s32 1, %s3
  %s6 = scalar_select 0, %s5, %s3
  $region1: #{tpu_custom_call.1} parent=0
    #allocation2 [shape = 'u8[1048576]{0}', space=vmem, size = 0x100000, scoped, tag = 'input window, operand 0, single buffered']
    #allocation3 [shape = 's32[1]{0}', space=sflag, size = 0x4, scoped, tag = 'scoped memory for tpu_custom_call.1']
    #allocation4 [shape = 's32[1]{0}', space=sflag, size = 0x4, scoped, tag = 'scoped memory for tpu_custom_call.1']
    #allocation5 [shape = 'u8[1048576]{0}', space=vmem, size = 0x100000, scoped, tag = 'input window, operand 1, single buffered']
    #allocation6 [shape = 's32[1]{0}', space=sflag, size = 0x4, scoped, tag = 'scoped memory for tpu_custom_call.1']
    #allocation7 [shape = 'u8[1048576]{0}', space=vmem, size = 0x100000, scoped, tag = 'output window, operand 0, single buffered']
    %7 = vsyncpa [#allocation3], 0
    %8 = vsyncpa [#allocation6], 0
    %9 = vsyncpa [#allocation4], 0
    // Predicated region
    $region2: #{tpu_custom_call.1} parent=1 // pred_check
      _
    $region3: #{tpu_custom_call.1} parent=1 // pred_check_branch
      %11 = sbr.rel (0) target = $region5
    $region4: #{tpu_custom_call.1} parent=1 // pred_region
      %s13 = ssub.s32 32768, 32768
      %14 = vsyncadd [#allocation3], %s13
      %s15 = sshll.u32 [#allocation2], 4
      %s16 = int_to_ptr.vmem [resolvable:$true] %s15
      %21 = dma.hbm_to_vmem [thread:$0]  %s0, 32768, %s16, [#allocation3], 128, 128, 8
    $region5: #{tpu_custom_call.1} parent=1 // pred_fallthru
      _
    // Predicated region
    $region6: #{tpu_custom_call.1} parent=1 // pred_check
      _
    $region7: #{tpu_custom_call.1} parent=1 // pred_check_branch
      %23 = sbr.rel (0) target = $region9
    $region8: #{tpu_custom_call.1} parent=1 // pred_region
      %s25 = ssub.s32 32768, 32768
      %26 = vsyncadd [#allocation6], %s25
      %s27 = sshll.u32 [#allocation5], 4
      %s28 = int_to_ptr.vmem [resolvable:$true] %s27
      %33 = dma.hbm_to_vmem [thread:$0]  %s1, 32768, %s28, [#allocation6], 128, 128, 8
    $region9: #{tpu_custom_call.1} parent=1 // pred_fallthru
      _
    // Predicated region
    $region10: #{tpu_custom_call.1} parent=1 // pred_check
      _
    $region11: #{tpu_custom_call.1} parent=1 // pred_check_branch
      %35 = sbr.rel (0) target = $region13
    $region12: #{tpu_custom_call.1} parent=1 // pred_region
      %36 = dma.done [#allocation3], 32768
    $region13: #{tpu_custom_call.1} parent=1 // pred_fallthru
      _
    // Predicated region
    $region14: #{tpu_custom_call.1} parent=1 // pred_check
      _
    $region15: #{tpu_custom_call.1} parent=1 // pred_check_branch
      %38 = sbr.rel (0) target = $region17
    $region16: #{tpu_custom_call.1} parent=1 // pred_region
      %39 = dma.done [#allocation6], 32768
    $region17: #{tpu_custom_call.1} parent=1 // pred_fallthru
      _
    %v40 = vld [vmem:[#allocation2] sm:$0xff]
    %v41 = vld [vmem:[#allocation2 + $0x8] sm:$0xff]
    %v42 = vld [vmem:[#allocation2 + $0x10] sm:$0xff]
    %v43 = vld [vmem:[#allocation2 + $0x18] sm:$0xff]
    %v44 = vld [vmem:[#allocation2 + $0x20] sm:$0xff]
    %v45 = vld [vmem:[#allocation2 + $0x28] sm:$0xff]
    %v46 = vld [vmem:[#allocation2 + $0x30] sm:$0xff]
    %v47 = vld [vmem:[#allocation2 + $0x38] sm:$0xff]
    %v48 = vld [vmem:[#allocation2 + $0x40] sm:$0xff]
    %v49 = vld [vmem:[#allocation2 + $0x48] sm:$0xff]
    %v50 = vld [vmem:[#allocation2 + $0x50] sm:$0xff]
    %v51 = vld [vmem:[#allocation2 + $0x58] sm:$0xff]
    %v52 = vld [vmem:[#allocation2 + $0x60] sm:$0xff]
    %v53 = vld [vmem:[#allocation2 + $0x68] sm:$0xff]
    %v54 = vld [vmem:[#allocation2 + $0x70] sm:$0xff]
    %v55 = vld [vmem:[#allocation2 + $0x78] sm:$0xff]
    %v56 = vld [vmem:[#allocation2 + $0x80] sm:$0xff]
    %v57 = vld [vmem:[#allocation2 + $0x88] sm:$0xff]
    %v58 = vld [vmem:[#allocation2 + $0x90] sm:$0xff]
    %v59 = vld [vmem:[#allocation2 + $0x98] sm:$0xff]
    %v60 = vld [vmem:[#allocation2 + $0xa0] sm:$0xff]
    %v61 = vld [vmem:[#allocation2 + $0xa8] sm:$0xff]
    %v62 = vld [vmem:[#allocation2 + $0xb0] sm:$0xff]
    %v63 = vld [vmem:[#allocation2 + $0xb8] sm:$0xff]
    %v64 = vld [vmem:[#allocation2 + $0xc0] sm:$0xff]
    %v65 = vld [vmem:[#allocation2 + $0xc8] sm:$0xff]
    %v66 = vld [vmem:[#allocation2 + $0xd0] sm:$0xff]
    %v67 = vld [vmem:[#allocation2 + $0xd8] sm:$0xff]
    %v68 = vld [vmem:[#allocation2 + $0xe0] sm:$0xff]
    %v69 = vld [vmem:[#allocation2 + $0xe8] sm:$0xff]
    %v70 = vld [vmem:[#allocation2 + $0xf0] sm:$0xff]
    %v71 = vld [vmem:[#allocation2 + $0xf8] sm:$0xff]
    %v72 = vld [vmem:[#allocation2 + $0x100] sm:$0xff]
    %v73 = vld [vmem:[#allocation2 + $0x108] sm:$0xff]
    %v74 = vld [vmem:[#allocation2 + $0x110] sm:$0xff]
    %v75 = vld [vmem:[#allocation2 + $0x118] sm:$0xff]
    %v76 = vld [vmem:[#allocation2 + $0x120] sm:$0xff]
    %v77 = vld [vmem:[#allocation2 + $0x128] sm:$0xff]
    %v78 = vld [vmem:[#allocation2 + $0x130] sm:$0xff]
    %v79 = vld [vmem:[#allocation2 + $0x138] sm:$0xff]
    %v80 = vld [vmem:[#allocation2 + $0x140] sm:$0xff]
    %v81 = vld [vmem:[#allocation2 + $0x148] sm:$0xff]
    %v82 = vld [vmem:[#allocation2 + $0x150] sm:$0xff]
    %v83 = vld [vmem:[#allocation2 + $0x158] sm:$0xff]
    %v84 = vld [vmem:[#allocation2 + $0x160] sm:$0xff]
    %v85 = vld [vmem:[#allocation2 + $0x168] sm:$0xff]
    %v86 = vld [vmem:[#allocation2 + $0x170] sm:$0xff]
    %v87 = vld [vmem:[#allocation2 + $0x178] sm:$0xff]
    %v88 = vld [vmem:[#allocation2 + $0x180] sm:$0xff]
    %v89 = vld [vmem:[#allocation2 + $0x188] sm:$0xff]
    %v90 = vld [vmem:[#allocation2 + $0x190] sm:$0xff]
    %v91 = vld [vmem:[#allocation2 + $0x198] sm:$0xff]
    %v92 = vld [vmem:[#allocation2 + $0x1a0] sm:$0xff]
    %v93 = vld [vmem:[#allocation2 + $0x1a8] sm:$0xff]
    %v94 = vld [vmem:[#allocation2 + $0x1b0] sm:$0xff]
    %v95 = vld [vmem:[#allocation2 + $0x1b8] sm:$0xff]
    %v96 = vld [vmem:[#allocation2 + $0x1c0] sm:$0xff]
    %v97 = vld [vmem:[#allocation2 + $0x1c8] sm:$0xff]
    %v98 = vld [vmem:[#allocation2 + $0x1d0] sm:$0xff]
    %v99 = vld [vmem:[#allocation2 + $0x1d8] sm:$0xff]
    %v100 = vld [vmem:[#allocation2 + $0x1e0] sm:$0xff]
    %v101 = vld [vmem:[#allocation2 + $0x1e8] sm:$0xff]
    %v102 = vld [vmem:[#allocation2 + $0x1f0] sm:$0xff]
    %v103 = vld [vmem:[#allocation2 + $0x1f8] sm:$0xff]
    %v104 = vld [vmem:[#allocation2 + $0x200] sm:$0xff]
    %v105 = vld [vmem:[#allocation2 + $0x208] sm:$0xff]
    %v106 = vld [vmem:[#allocation2 + $0x210] sm:$0xff]
    %v107 = vld [vmem:[#allocation2 + $0x218] sm:$0xff]
    %v108 = vld [vmem:[#allocation2 + $0x220] sm:$0xff]
    %v109 = vld [vmem:[#allocation2 + $0x228] sm:$0xff]
    %v110 = vld [vmem:[#allocation2 + $0x230] sm:$0xff]
    %v111 = vld [vmem:[#allocation2 + $0x238] sm:$0xff]
    %v112 = vld [vmem:[#allocation2 + $0x240] sm:$0xff]
    %v113 = vld [vmem:[#allocation2 + $0x248] sm:$0xff]
    %v114 = vld [vmem:[#allocation2 + $0x250] sm:$0xff]
    %v115 = vld [vmem:[#allocation2 + $0x258] sm:$0xff]
    %v116 = vld [vmem:[#allocation2 + $0x260] sm:$0xff]
    %v117 = vld [vmem:[#allocation2 + $0x268] sm:$0xff]
    %v118 = vld [vmem:[#allocation2 + $0x270] sm:$0xff]
    %v119 = vld [vmem:[#allocation2 + $0x278] sm:$0xff]
    %v120 = vld [vmem:[#allocation2 + $0x280] sm:$0xff]
    %v121 = vld [vmem:[#allocation2 + $0x288] sm:$0xff]
    %v122 = vld [vmem:[#allocation2 + $0x290] sm:$0xff]
    %v123 = vld [vmem:[#allocation2 + $0x298] sm:$0xff]
    %v124 = vld [vmem:[#allocation2 + $0x2a0] sm:$0xff]
    %v125 = vld [vmem:[#allocation2 + $0x2a8] sm:$0xff]
    %v126 = vld [vmem:[#allocation2 + $0x2b0] sm:$0xff]
    %v127 = vld [vmem:[#allocation2 + $0x2b8] sm:$0xff]
    %v128 = vld [vmem:[#allocation2 + $0x2c0] sm:$0xff]
    %v129 = vld [vmem:[#allocation2 + $0x2c8] sm:$0xff]
    %v130 = vld [vmem:[#allocation2 + $0x2d0] sm:$0xff]
    %v131 = vld [vmem:[#allocation2 + $0x2d8] sm:$0xff]
    %v132 = vld [vmem:[#allocation2 + $0x2e0] sm:$0xff]
    %v133 = vld [vmem:[#allocation2 + $0x2e8] sm:$0xff]
    %v134 = vld [vmem:[#allocation2 + $0x2f0] sm:$0xff]
    %v135 = vld [vmem:[#allocation2 + $0x2f8] sm:$0xff]
    %v136 = vld [vmem:[#allocation2 + $0x300] sm:$0xff]
    %v137 = vld [vmem:[#allocation2 + $0x308] sm:$0xff]
    %v138 = vld [vmem:[#allocation2 + $0x310] sm:$0xff]
    %v139 = vld [vmem:[#allocation2 + $0x318] sm:$0xff]
    %v140 = vld [vmem:[#allocation2 + $0x320] sm:$0xff]
    %v141 = vld [vmem:[#allocation2 + $0x328] sm:$0xff]
    %v142 = vld [vmem:[#allocation2 + $0x330] sm:$0xff]
    %v143 = vld [vmem:[#allocation2 + $0x338] sm:$0xff]
    %v144 = vld [vmem:[#allocation2 + $0x340] sm:$0xff]
    %v145 = vld [vmem:[#allocation2 + $0x348] sm:$0xff]
    %v146 = vld [vmem:[#allocation2 + $0x350] sm:$0xff]
    %v147 = vld [vmem:[#allocation2 + $0x358] sm:$0xff]
    %v148 = vld [vmem:[#allocation2 + $0x360] sm:$0xff]
    %v149 = vld [vmem:[#allocation2 + $0x368] sm:$0xff]
    %v150 = vld [vmem:[#allocation2 + $0x370] sm:$0xff]
    %v151 = vld [vmem:[#allocation2 + $0x378] sm:$0xff]
    %v152 = vld [vmem:[#allocation2 + $0x380] sm:$0xff]
    %v153 = vld [vmem:[#allocation2 + $0x388] sm:$0xff]
    %v154 = vld [vmem:[#allocation2 + $0x390] sm:$0xff]
    %v155 = vld [vmem:[#allocation2 + $0x398] sm:$0xff]
    %v156 = vld [vmem:[#allocation2 + $0x3a0] sm:$0xff]
    %v157 = vld [vmem:[#allocation2 + $0x3a8] sm:$0xff]
    %v158 = vld [vmem:[#allocation2 + $0x3b0] sm:$0xff]
    %v159 = vld [vmem:[#allocation2 + $0x3b8] sm:$0xff]
    %v160 = vld [vmem:[#allocation2 + $0x3c0] sm:$0xff]
    %v161 = vld [vmem:[#allocation2 + $0x3c8] sm:$0xff]
    %v162 = vld [vmem:[#allocation2 + $0x3d0] sm:$0xff]
    %v163 = vld [vmem:[#allocation2 + $0x3d8] sm:$0xff]
    %v164 = vld [vmem:[#allocation2 + $0x3e0] sm:$0xff]
    %v165 = vld [vmem:[#allocation2 + $0x3e8] sm:$0xff]
    %v166 = vld [vmem:[#allocation2 + $0x3f0] sm:$0xff]
    %v167 = vld [vmem:[#allocation2 + $0x3f8] sm:$0xff]
    %v168 = vld [vmem:[#allocation2 + $0x400] sm:$0xff]
    %v169 = vld [vmem:[#allocation2 + $0x408] sm:$0xff]
    %v170 = vld [vmem:[#allocation2 + $0x410] sm:$0xff]
    %v171 = vld [vmem:[#allocation2 + $0x418] sm:$0xff]
    %v172 = vld [vmem:[#allocation2 + $0x420] sm:$0xff]
    %v173 = vld [vmem:[#allocation2 + $0x428] sm:$0xff]
    %v174 = vld [vmem:[#allocation2 + $0x430] sm:$0xff]
    %v175 = vld [vmem:[#allocation2 + $0x438] sm:$0xff]
    %v176 = vld [vmem:[#allocation2 + $0x440] sm:$0xff]
    %v177 = vld [vmem:[#allocation2 + $0x448] sm:$0xff]
    %v178 = vld [vmem:[#allocation2 + $0x450] sm:$0xff]
    %v179 = vld [vmem:[#allocation2 + $0x458] sm:$0xff]
    %v180 = vld [vmem:[#allocation2 + $0x460] sm:$0xff]
    %v181 = vld [vmem:[#allocation2 + $0x468] sm:$0xff]
    %v182 = vld [vmem:[#allocation2 + $0x470] sm:$0xff]
    %v183 = vld [vmem:[#allocation2 + $0x478] sm:$0xff]
    %v184 = vld [vmem:[#allocation2 + $0x480] sm:$0xff]
    %v185 = vld [vmem:[#allocation2 + $0x488] sm:$0xff]
    %v186 = vld [vmem:[#allocation2 + $0x490] sm:$0xff]
    %v187 = vld [vmem:[#allocation2 + $0x498] sm:$0xff]
    %v188 = vld [vmem:[#allocation2 + $0x4a0] sm:$0xff]
    %v189 = vld [vmem:[#allocation2 + $0x4a8] sm:$0xff]
    %v190 = vld [vmem:[#allocation2 + $0x4b0] sm:$0xff]
    %v191 = vld [vmem:[#allocation2 + $0x4b8] sm:$0xff]
    %v192 = vld [vmem:[#allocation2 + $0x4c0] sm:$0xff]
    %v193 = vld [vmem:[#allocation2 + $0x4c8] sm:$0xff]
    %v194 = vld [vmem:[#allocation2 + $0x4d0] sm:$0xff]
    %v195 = vld [vmem:[#allocation2 + $0x4d8] sm:$0xff]
    %v196 = vld [vmem:[#allocation2 + $0x4e0] sm:$0xff]
    %v197 = vld [vmem:[#allocation2 + $0x4e8] sm:$0xff]
    %v198 = vld [vmem:[#allocation2 + $0x4f0] sm:$0xff]
    %v199 = vld [vmem:[#allocation2 + $0x4f8] sm:$0xff]
    %v200 = vld [vmem:[#allocation2 + $0x500] sm:$0xff]
    %v201 = vld [vmem:[#allocation2 + $0x508] sm:$0xff]
    %v202 = vld [vmem:[#allocation2 + $0x510] sm:$0xff]
    %v203 = vld [vmem:[#allocation2 + $0x518] sm:$0xff]
    %v204 = vld [vmem:[#allocation2 + $0x520] sm:$0xff]
    %v205 = vld [vmem:[#allocation2 + $0x528] sm:$0xff]
    %v206 = vld [vmem:[#allocation2 + $0x530] sm:$0xff]
    %v207 = vld [vmem:[#allocation2 + $0x538] sm:$0xff]
    %v208 = vld [vmem:[#allocation2 + $0x540] sm:$0xff]
    %v209 = vld [vmem:[#allocation2 + $0x548] sm:$0xff]
    %v210 = vld [vmem:[#allocation2 + $0x550] sm:$0xff]
    %v211 = vld [vmem:[#allocation2 + $0x558] sm:$0xff]
    %v212 = vld [vmem:[#allocation2 + $0x560] sm:$0xff]
    %v213 = vld [vmem:[#allocation2 + $0x568] sm:$0xff]
    %v214 = vld [vmem:[#allocation2 + $0x570] sm:$0xff]
    %v215 = vld [vmem:[#allocation2 + $0x578] sm:$0xff]
    %v216 = vld [vmem:[#allocation2 + $0x580] sm:$0xff]
    %v217 = vld [vmem:[#allocation2 + $0x588] sm:$0xff]
    %v218 = vld [vmem:[#allocation2 + $0x590] sm:$0xff]
    %v219 = vld [vmem:[#allocation2 + $0x598] sm:$0xff]
    %v220 = vld [vmem:[#allocation2 + $0x5a0] sm:$0xff]
    %v221 = vld [vmem:[#allocation2 + $0x5a8] sm:$0xff]
    %v222 = vld [vmem:[#allocation2 + $0x5b0] sm:$0xff]
    %v223 = vld [vmem:[#allocation2 + $0x5b8] sm:$0xff]
    %v224 = vld [vmem:[#allocation2 + $0x5c0] sm:$0xff]
    %v225 = vld [vmem:[#allocation2 + $0x5c8] sm:$0xff]
    %v226 = vld [vmem:[#allocation2 + $0x5d0] sm:$0xff]
    %v227 = vld [vmem:[#allocation2 + $0x5d8] sm:$0xff]
    %v228 = vld [vmem:[#allocation2 + $0x5e0] sm:$0xff]
    %v229 = vld [vmem:[#allocation2 + $0x5e8] sm:$0xff]
    %v230 = vld [vmem:[#allocation2 + $0x5f0] sm:$0xff]
    %v231 = vld [vmem:[#allocation2 + $0x5f8] sm:$0xff]
    %v232 = vld [vmem:[#allocation2 + $0x600] sm:$0xff]
    %v233 = vld [vmem:[#allocation2 + $0x608] sm:$0xff]
    %v234 = vld [vmem:[#allocation2 + $0x610] sm:$0xff]
    %v235 = vld [vmem:[#allocation2 + $0x618] sm:$0xff]
    %v236 = vld [vmem:[#allocation2 + $0x620] sm:$0xff]
    %v237 = vld [vmem:[#allocation2 + $0x628] sm:$0xff]
    %v238 = vld [vmem:[#allocation2 + $0x630] sm:$0xff]
    %v239 = vld [vmem:[#allocation2 + $0x638] sm:$0xff]
    %v240 = vld [vmem:[#allocation2 + $0x640] sm:$0xff]
    %v241 = vld [vmem:[#allocation2 + $0x648] sm:$0xff]
    %v242 = vld [vmem:[#allocation2 + $0x650] sm:$0xff]
    %v243 = vld [vmem:[#allocation2 + $0x658] sm:$0xff]
    %v244 = vld [vmem:[#allocation2 + $0x660] sm:$0xff]
    %v245 = vld [vmem:[#allocation2 + $0x668] sm:$0xff]
    %v246 = vld [vmem:[#allocation2 + $0x670] sm:$0xff]
    %v247 = vld [vmem:[#allocation2 + $0x678] sm:$0xff]
    %v248 = vld [vmem:[#allocation2 + $0x680] sm:$0xff]
    %v249 = vld [vmem:[#allocation2 + $0x688] sm:$0xff]
    %v250 = vld [vmem:[#allocation2 + $0x690] sm:$0xff]
    %v251 = vld [vmem:[#allocation2 + $0x698] sm:$0xff]
    %v252 = vld [vmem:[#allocation2 + $0x6a0] sm:$0xff]
    %v253 = vld [vmem:[#allocation2 + $0x6a8] sm:$0xff]
    %v254 = vld [vmem:[#allocation2 + $0x6b0] sm:$0xff]
    %v255 = vld [vmem:[#allocation2 + $0x6b8] sm:$0xff]
    %v256 = vld [vmem:[#allocation2 + $0x6c0] sm:$0xff]
    %v257 = vld [vmem:[#allocation2 + $0x6c8] sm:$0xff]
    %v258 = vld [vmem:[#allocation2 + $0x6d0] sm:$0xff]
    %v259 = vld [vmem:[#allocation2 + $0x6d8] sm:$0xff]
    %v260 = vld [vmem:[#allocation2 + $0x6e0] sm:$0xff]
    %v261 = vld [vmem:[#allocation2 + $0x6e8] sm:$0xff]
    %v262 = vld [vmem:[#allocation2 + $0x6f0] sm:$0xff]
    %v263 = vld [vmem:[#allocation2 + $0x6f8] sm:$0xff]
    %v264 = vld [vmem:[#allocation2 + $0x700] sm:$0xff]
    %v265 = vld [vmem:[#allocation2 + $0x708] sm:$0xff]
    %v266 = vld [vmem:[#allocation2 + $0x710] sm:$0xff]
    %v267 = vld [vmem:[#allocation2 + $0x718] sm:$0xff]
    %v268 = vld [vmem:[#allocation2 + $0x720] sm:$0xff]
    %v269 = vld [vmem:[#allocation2 + $0x728] sm:$0xff]
    %v270 = vld [vmem:[#allocation2 + $0x730] sm:$0xff]
    %v271 = vld [vmem:[#allocation2 + $0x738] sm:$0xff]
    %v272 = vld [vmem:[#allocation2 + $0x740] sm:$0xff]
    %v273 = vld [vmem:[#allocation2 + $0x748] sm:$0xff]
    %v274 = vld [vmem:[#allocation2 + $0x750] sm:$0xff]
    %v275 = vld [vmem:[#allocation2 + $0x758] sm:$0xff]
    %v276 = vld [vmem:[#allocation2 + $0x760] sm:$0xff]
    %v277 = vld [vmem:[#allocation2 + $0x768] sm:$0xff]
    %v278 = vld [vmem:[#allocation2 + $0x770] sm:$0xff]
    %v279 = vld [vmem:[#allocation2 + $0x778] sm:$0xff]
    %v280 = vld [vmem:[#allocation2 + $0x780] sm:$0xff]
    %v281 = vld [vmem:[#allocation2 + $0x788] sm:$0xff]
    %v282 = vld [vmem:[#allocation2 + $0x790] sm:$0xff]
    %v283 = vld [vmem:[#allocation2 + $0x798] sm:$0xff]
    %v284 = vld [vmem:[#allocation2 + $0x7a0] sm:$0xff]
    %v285 = vld [vmem:[#allocation2 + $0x7a8] sm:$0xff]
    %v286 = vld [vmem:[#allocation2 + $0x7b0] sm:$0xff]
    %v287 = vld [vmem:[#allocation2 + $0x7b8] sm:$0xff]
    %v288 = vld [vmem:[#allocation2 + $0x7c0] sm:$0xff]
    %v289 = vld [vmem:[#allocation2 + $0x7c8] sm:$0xff]
    %v290 = vld [vmem:[#allocation2 + $0x7d0] sm:$0xff]
    %v291 = vld [vmem:[#allocation2 + $0x7d8] sm:$0xff]
    %v292 = vld [vmem:[#allocation2 + $0x7e0] sm:$0xff]
    %v293 = vld [vmem:[#allocation2 + $0x7e8] sm:$0xff]
    %v294 = vld [vmem:[#allocation2 + $0x7f0] sm:$0xff]
    %v295 = vld [vmem:[#allocation2 + $0x7f8] sm:$0xff]
    %v296 = vld [vmem:[#allocation5] sm:$0xff]
    %v297 = vld [vmem:[#allocation5 + $0x8] sm:$0xff]
    %v298 = vld [vmem:[#allocation5 + $0x10] sm:$0xff]
    %v299 = vld [vmem:[#allocation5 + $0x18] sm:$0xff]
    %v300 = vld [vmem:[#allocation5 + $0x20] sm:$0xff]
    %v301 = vld [vmem:[#allocation5 + $0x28] sm:$0xff]
    %v302 = vld [vmem:[#allocation5 + $0x30] sm:$0xff]
    %v303 = vld [vmem:[#allocation5 + $0x38] sm:$0xff]
    %v304 = vld [vmem:[#allocation5 + $0x40] sm:$0xff]
    %v305 = vld [vmem:[#allocation5 + $0x48] sm:$0xff]
    %v306 = vld [vmem:[#allocation5 + $0x50] sm:$0xff]
    %v307 = vld [vmem:[#allocation5 + $0x58] sm:$0xff]
    %v308 = vld [vmem:[#allocation5 + $0x60] sm:$0xff]
    %v309 = vld [vmem:[#allocation5 + $0x68] sm:$0xff]
    %v310 = vld [vmem:[#allocation5 + $0x70] sm:$0xff]
    %v311 = vld [vmem:[#allocation5 + $0x78] sm:$0xff]
    %v312 = vld [vmem:[#allocation5 + $0x80] sm:$0xff]
    %v313 = vld [vmem:[#allocation5 + $0x88] sm:$0xff]
    %v314 = vld [vmem:[#allocation5 + $0x90] sm:$0xff]
    %v315 = vld [vmem:[#allocation5 + $0x98] sm:$0xff]
    %v316 = vld [vmem:[#allocation5 + $0xa0] sm:$0xff]
    %v317 = vld [vmem:[#allocation5 + $0xa8] sm:$0xff]
    %v318 = vld [vmem:[#allocation5 + $0xb0] sm:$0xff]
    %v319 = vld [vmem:[#allocation5 + $0xb8] sm:$0xff]
    %v320 = vld [vmem:[#allocation5 + $0xc0] sm:$0xff]
    %v321 = vld [vmem:[#allocation5 + $0xc8] sm:$0xff]
    %v322 = vld [vmem:[#allocation5 + $0xd0] sm:$0xff]
    %v323 = vld [vmem:[#allocation5 + $0xd8] sm:$0xff]
    %v324 = vld [vmem:[#allocation5 + $0xe0] sm:$0xff]
    %v325 = vld [vmem:[#allocation5 + $0xe8] sm:$0xff]
    %v326 = vld [vmem:[#allocation5 + $0xf0] sm:$0xff]
    %v327 = vld [vmem:[#allocation5 + $0xf8] sm:$0xff]
    %v328 = vld [vmem:[#allocation5 + $0x100] sm:$0xff]
    %v329 = vld [vmem:[#allocation5 + $0x108] sm:$0xff]
    %v330 = vld [vmem:[#allocation5 + $0x110] sm:$0xff]
    %v331 = vld [vmem:[#allocation5 + $0x118] sm:$0xff]
    %v332 = vld [vmem:[#allocation5 + $0x120] sm:$0xff]
    %v333 = vld [vmem:[#allocation5 + $0x128] sm:$0xff]
    %v334 = vld [vmem:[#allocation5 + $0x130] sm:$0xff]
    %v335 = vld [vmem:[#allocation5 + $0x138] sm:$0xff]
    %v336 = vld [vmem:[#allocation5 + $0x140] sm:$0xff]
    %v337 = vld [vmem:[#allocation5 + $0x148] sm:$0xff]
    %v338 = vld [vmem:[#allocation5 + $0x150] sm:$0xff]
    %v339 = vld [vmem:[#allocation5 + $0x158] sm:$0xff]
    %v340 = vld [vmem:[#allocation5 + $0x160] sm:$0xff]
    %v341 = vld [vmem:[#allocation5 + $0x168] sm:$0xff]
    %v342 = vld [vmem:[#allocation5 + $0x170] sm:$0xff]
    %v343 = vld [vmem:[#allocation5 + $0x178] sm:$0xff]
    %v344 = vld [vmem:[#allocation5 + $0x180] sm:$0xff]
    %v345 = vld [vmem:[#allocation5 + $0x188] sm:$0xff]
    %v346 = vld [vmem:[#allocation5 + $0x190] sm:$0xff]
    %v347 = vld [vmem:[#allocation5 + $0x198] sm:$0xff]
    %v348 = vld [vmem:[#allocation5 + $0x1a0] sm:$0xff]
    %v349 = vld [vmem:[#allocation5 + $0x1a8] sm:$0xff]
    %v350 = vld [vmem:[#allocation5 + $0x1b0] sm:$0xff]
    %v351 = vld [vmem:[#allocation5 + $0x1b8] sm:$0xff]
    %v352 = vld [vmem:[#allocation5 + $0x1c0] sm:$0xff]
    %v353 = vld [vmem:[#allocation5 + $0x1c8] sm:$0xff]
    %v354 = vld [vmem:[#allocation5 + $0x1d0] sm:$0xff]
    %v355 = vld [vmem:[#allocation5 + $0x1d8] sm:$0xff]
    %v356 = vld [vmem:[#allocation5 + $0x1e0] sm:$0xff]
    %v357 = vld [vmem:[#allocation5 + $0x1e8] sm:$0xff]
    %v358 = vld [vmem:[#allocation5 + $0x1f0] sm:$0xff]
    %v359 = vld [vmem:[#allocation5 + $0x1f8] sm:$0xff]
    %v360 = vld [vmem:[#allocation5 + $0x200] sm:$0xff]
    %v361 = vld [vmem:[#allocation5 + $0x208] sm:$0xff]
    %v362 = vld [vmem:[#allocation5 + $0x210] sm:$0xff]
    %v363 = vld [vmem:[#allocation5 + $0x218] sm:$0xff]
    %v364 = vld [vmem:[#allocation5 + $0x220] sm:$0xff]
    %v365 = vld [vmem:[#allocation5 + $0x228] sm:$0xff]
    %v366 = vld [vmem:[#allocation5 + $0x230] sm:$0xff]
    %v367 = vld [vmem:[#allocation5 + $0x238] sm:$0xff]
    %v368 = vld [vmem:[#allocation5 + $0x240] sm:$0xff]
    %v369 = vld [vmem:[#allocation5 + $0x248] sm:$0xff]
    %v370 = vld [vmem:[#allocation5 + $0x250] sm:$0xff]
    %v371 = vld [vmem:[#allocation5 + $0x258] sm:$0xff]
    %v372 = vld [vmem:[#allocation5 + $0x260] sm:$0xff]
    %v373 = vld [vmem:[#allocation5 + $0x268] sm:$0xff]
    %v374 = vld [vmem:[#allocation5 + $0x270] sm:$0xff]
    %v375 = vld [vmem:[#allocation5 + $0x278] sm:$0xff]
    %v376 = vld [vmem:[#allocation5 + $0x280] sm:$0xff]
    %v377 = vld [vmem:[#allocation5 + $0x288] sm:$0xff]
    %v378 = vld [vmem:[#allocation5 + $0x290] sm:$0xff]
    %v379 = vld [vmem:[#allocation5 + $0x298] sm:$0xff]
    %v380 = vld [vmem:[#allocation5 + $0x2a0] sm:$0xff]
    %v381 = vld [vmem:[#allocation5 + $0x2a8] sm:$0xff]
    %v382 = vld [vmem:[#allocation5 + $0x2b0] sm:$0xff]
    %v383 = vld [vmem:[#allocation5 + $0x2b8] sm:$0xff]
    %v384 = vld [vmem:[#allocation5 + $0x2c0] sm:$0xff]
    %v385 = vld [vmem:[#allocation5 + $0x2c8] sm:$0xff]
    %v386 = vld [vmem:[#allocation5 + $0x2d0] sm:$0xff]
    %v387 = vld [vmem:[#allocation5 + $0x2d8] sm:$0xff]
    %v388 = vld [vmem:[#allocation5 + $0x2e0] sm:$0xff]
    %v389 = vld [vmem:[#allocation5 + $0x2e8] sm:$0xff]
    %v390 = vld [vmem:[#allocation5 + $0x2f0] sm:$0xff]
    %v391 = vld [vmem:[#allocation5 + $0x2f8] sm:$0xff]
    %v392 = vld [vmem:[#allocation5 + $0x300] sm:$0xff]
    %v393 = vld [vmem:[#allocation5 + $0x308] sm:$0xff]
    %v394 = vld [vmem:[#allocation5 + $0x310] sm:$0xff]
    %v395 = vld [vmem:[#allocation5 + $0x318] sm:$0xff]
    %v396 = vld [vmem:[#allocation5 + $0x320] sm:$0xff]
    %v397 = vld [vmem:[#allocation5 + $0x328] sm:$0xff]
    %v398 = vld [vmem:[#allocation5 + $0x330] sm:$0xff]
    %v399 = vld [vmem:[#allocation5 + $0x338] sm:$0xff]
    %v400 = vld [vmem:[#allocation5 + $0x340] sm:$0xff]
    %v401 = vld [vmem:[#allocation5 + $0x348] sm:$0xff]
    %v402 = vld [vmem:[#allocation5 + $0x350] sm:$0xff]
    %v403 = vld [vmem:[#allocation5 + $0x358] sm:$0xff]
    %v404 = vld [vmem:[#allocation5 + $0x360] sm:$0xff]
    %v405 = vld [vmem:[#allocation5 + $0x368] sm:$0xff]
    %v406 = vld [vmem:[#allocation5 + $0x370] sm:$0xff]
    %v407 = vld [vmem:[#allocation5 + $0x378] sm:$0xff]
    %v408 = vld [vmem:[#allocation5 + $0x380] sm:$0xff]
    %v409 = vld [vmem:[#allocation5 + $0x388] sm:$0xff]
    %v410 = vld [vmem:[#allocation5 + $0x390] sm:$0xff]
    %v411 = vld [vmem:[#allocation5 + $0x398] sm:$0xff]
    %v412 = vld [vmem:[#allocation5 + $0x3a0] sm:$0xff]
    %v413 = vld [vmem:[#allocation5 + $0x3a8] sm:$0xff]
    %v414 = vld [vmem:[#allocation5 + $0x3b0] sm:$0xff]
    %v415 = vld [vmem:[#allocation5 + $0x3b8] sm:$0xff]
    %v416 = vld [vmem:[#allocation5 + $0x3c0] sm:$0xff]
    %v417 = vld [vmem:[#allocation5 + $0x3c8] sm:$0xff]
    %v418 = vld [vmem:[#allocation5 + $0x3d0] sm:$0xff]
    %v419 = vld [vmem:[#allocation5 + $0x3d8] sm:$0xff]
    %v420 = vld [vmem:[#allocation5 + $0x3e0] sm:$0xff]
    %v421 = vld [vmem:[#allocation5 + $0x3e8] sm:$0xff]
    %v422 = vld [vmem:[#allocation5 + $0x3f0] sm:$0xff]
    %v423 = vld [vmem:[#allocation5 + $0x3f8] sm:$0xff]
    %v424 = vld [vmem:[#allocation5 + $0x400] sm:$0xff]
    %v425 = vld [vmem:[#allocation5 + $0x408] sm:$0xff]
    %v426 = vld [vmem:[#allocation5 + $0x410] sm:$0xff]
    %v427 = vld [vmem:[#allocation5 + $0x418] sm:$0xff]
    %v428 = vld [vmem:[#allocation5 + $0x420] sm:$0xff]
    %v429 = vld [vmem:[#allocation5 + $0x428] sm:$0xff]
    %v430 = vld [vmem:[#allocation5 + $0x430] sm:$0xff]
    %v431 = vld [vmem:[#allocation5 + $0x438] sm:$0xff]
    %v432 = vld [vmem:[#allocation5 + $0x440] sm:$0xff]
    %v433 = vld [vmem:[#allocation5 + $0x448] sm:$0xff]
    %v434 = vld [vmem:[#allocation5 + $0x450] sm:$0xff]
    %v435 = vld [vmem:[#allocation5 + $0x458] sm:$0xff]
    %v436 = vld [vmem:[#allocation5 + $0x460] sm:$0xff]
    %v437 = vld [vmem:[#allocation5 + $0x468] sm:$0xff]
    %v438 = vld [vmem:[#allocation5 + $0x470] sm:$0xff]
    %v439 = vld [vmem:[#allocation5 + $0x478] sm:$0xff]
    %v440 = vld [vmem:[#allocation5 + $0x480] sm:$0xff]
    %v441 = vld [vmem:[#allocation5 + $0x488] sm:$0xff]
    %v442 = vld [vmem:[#allocation5 + $0x490] sm:$0xff]
    %v443 = vld [vmem:[#allocation5 + $0x498] sm:$0xff]
    %v444 = vld [vmem:[#allocation5 + $0x4a0] sm:$0xff]
    %v445 = vld [vmem:[#allocation5 + $0x4a8] sm:$0xff]
    %v446 = vld [vmem:[#allocation5 + $0x4b0] sm:$0xff]
    %v447 = vld [vmem:[#allocation5 + $0x4b8] sm:$0xff]
    %v448 = vld [vmem:[#allocation5 + $0x4c0] sm:$0xff]
    %v449 = vld [vmem:[#allocation5 + $0x4c8] sm:$0xff]
    %v450 = vld [vmem:[#allocation5 + $0x4d0] sm:$0xff]
    %v451 = vld [vmem:[#allocation5 + $0x4d8] sm:$0xff]
    %v452 = vld [vmem:[#allocation5 + $0x4e0] sm:$0xff]
    %v453 = vld [vmem:[#allocation5 + $0x4e8] sm:$0xff]
    %v454 = vld [vmem:[#allocation5 + $0x4f0] sm:$0xff]
    %v455 = vld [vmem:[#allocation5 + $0x4f8] sm:$0xff]
    %v456 = vld [vmem:[#allocation5 + $0x500] sm:$0xff]
    %v457 = vld [vmem:[#allocation5 + $0x508] sm:$0xff]
    %v458 = vld [vmem:[#allocation5 + $0x510] sm:$0xff]
    %v459 = vld [vmem:[#allocation5 + $0x518] sm:$0xff]
    %v460 = vld [vmem:[#allocation5 + $0x520] sm:$0xff]
    %v461 = vld [vmem:[#allocation5 + $0x528] sm:$0xff]
    %v462 = vld [vmem:[#allocation5 + $0x530] sm:$0xff]
    %v463 = vld [vmem:[#allocation5 + $0x538] sm:$0xff]
    %v464 = vld [vmem:[#allocation5 + $0x540] sm:$0xff]
    %v465 = vld [vmem:[#allocation5 + $0x548] sm:$0xff]
    %v466 = vld [vmem:[#allocation5 + $0x550] sm:$0xff]
    %v467 = vld [vmem:[#allocation5 + $0x558] sm:$0xff]
    %v468 = vld [vmem:[#allocation5 + $0x560] sm:$0xff]
    %v469 = vld [vmem:[#allocation5 + $0x568] sm:$0xff]
    %v470 = vld [vmem:[#allocation5 + $0x570] sm:$0xff]
    %v471 = vld [vmem:[#allocation5 + $0x578] sm:$0xff]
    %v472 = vld [vmem:[#allocation5 + $0x580] sm:$0xff]
    %v473 = vld [vmem:[#allocation5 + $0x588] sm:$0xff]
    %v474 = vld [vmem:[#allocation5 + $0x590] sm:$0xff]
    %v475 = vld [vmem:[#allocation5 + $0x598] sm:$0xff]
    %v476 = vld [vmem:[#allocation5 + $0x5a0] sm:$0xff]
    %v477 = vld [vmem:[#allocation5 + $0x5a8] sm:$0xff]
    %v478 = vld [vmem:[#allocation5 + $0x5b0] sm:$0xff]
    %v479 = vld [vmem:[#allocation5 + $0x5b8] sm:$0xff]
    %v480 = vld [vmem:[#allocation5 + $0x5c0] sm:$0xff]
    %v481 = vld [vmem:[#allocation5 + $0x5c8] sm:$0xff]
    %v482 = vld [vmem:[#allocation5 + $0x5d0] sm:$0xff]
    %v483 = vld [vmem:[#allocation5 + $0x5d8] sm:$0xff]
    %v484 = vld [vmem:[#allocation5 + $0x5e0] sm:$0xff]
    %v485 = vld [vmem:[#allocation5 + $0x5e8] sm:$0xff]
    %v486 = vld [vmem:[#allocation5 + $0x5f0] sm:$0xff]
    %v487 = vld [vmem:[#allocation5 + $0x5f8] sm:$0xff]
    %v488 = vld [vmem:[#allocation5 + $0x600] sm:$0xff]
    %v489 = vld [vmem:[#allocation5 + $0x608] sm:$0xff]
    %v490 = vld [vmem:[#allocation5 + $0x610] sm:$0xff]
    %v491 = vld [vmem:[#allocation5 + $0x618] sm:$0xff]
    %v492 = vld [vmem:[#allocation5 + $0x620] sm:$0xff]
    %v493 = vld [vmem:[#allocation5 + $0x628] sm:$0xff]
    %v494 = vld [vmem:[#allocation5 + $0x630] sm:$0xff]
    %v495 = vld [vmem:[#allocation5 + $0x638] sm:$0xff]
    %v496 = vld [vmem:[#allocation5 + $0x640] sm:$0xff]
    %v497 = vld [vmem:[#allocation5 + $0x648] sm:$0xff]
    %v498 = vld [vmem:[#allocation5 + $0x650] sm:$0xff]
    %v499 = vld [vmem:[#allocation5 + $0x658] sm:$0xff]
    %v500 = vld [vmem:[#allocation5 + $0x660] sm:$0xff]
    %v501 = vld [vmem:[#allocation5 + $0x668] sm:$0xff]
    %v502 = vld [vmem:[#allocation5 + $0x670] sm:$0xff]
    %v503 = vld [vmem:[#allocation5 + $0x678] sm:$0xff]
    %v504 = vld [vmem:[#allocation5 + $0x680] sm:$0xff]
    %v505 = vld [vmem:[#allocation5 + $0x688] sm:$0xff]
    %v506 = vld [vmem:[#allocation5 + $0x690] sm:$0xff]
    %v507 = vld [vmem:[#allocation5 + $0x698] sm:$0xff]
    %v508 = vld [vmem:[#allocation5 + $0x6a0] sm:$0xff]
    %v509 = vld [vmem:[#allocation5 + $0x6a8] sm:$0xff]
    %v510 = vld [vmem:[#allocation5 + $0x6b0] sm:$0xff]
    %v511 = vld [vmem:[#allocation5 + $0x6b8] sm:$0xff]
    %v512 = vld [vmem:[#allocation5 + $0x6c0] sm:$0xff]
    %v513 = vld [vmem:[#allocation5 + $0x6c8] sm:$0xff]
    %v514 = vld [vmem:[#allocation5 + $0x6d0] sm:$0xff]
    %v515 = vld [vmem:[#allocation5 + $0x6d8] sm:$0xff]
    %v516 = vld [vmem:[#allocation5 + $0x6e0] sm:$0xff]
    %v517 = vld [vmem:[#allocation5 + $0x6e8] sm:$0xff]
    %v518 = vld [vmem:[#allocation5 + $0x6f0] sm:$0xff]
    %v519 = vld [vmem:[#allocation5 + $0x6f8] sm:$0xff]
    %v520 = vld [vmem:[#allocation5 + $0x700] sm:$0xff]
    %v521 = vld [vmem:[#allocation5 + $0x708] sm:$0xff]
    %v522 = vld [vmem:[#allocation5 + $0x710] sm:$0xff]
    %v523 = vld [vmem:[#allocation5 + $0x718] sm:$0xff]
    %v524 = vld [vmem:[#allocation5 + $0x720] sm:$0xff]
    %v525 = vld [vmem:[#allocation5 + $0x728] sm:$0xff]
    %v526 = vld [vmem:[#allocation5 + $0x730] sm:$0xff]
    %v527 = vld [vmem:[#allocation5 + $0x738] sm:$0xff]
    %v528 = vld [vmem:[#allocation5 + $0x740] sm:$0xff]
    %v529 = vld [vmem:[#allocation5 + $0x748] sm:$0xff]
    %v530 = vld [vmem:[#allocation5 + $0x750] sm:$0xff]
    %v531 = vld [vmem:[#allocation5 + $0x758] sm:$0xff]
    %v532 = vld [vmem:[#allocation5 + $0x760] sm:$0xff]
    %v533 = vld [vmem:[#allocation5 + $0x768] sm:$0xff]
    %v534 = vld [vmem:[#allocation5 + $0x770] sm:$0xff]
    %v535 = vld [vmem:[#allocation5 + $0x778] sm:$0xff]
    %v536 = vld [vmem:[#allocation5 + $0x780] sm:$0xff]
    %v537 = vld [vmem:[#allocation5 + $0x788] sm:$0xff]
    %v538 = vld [vmem:[#allocation5 + $0x790] sm:$0xff]
    %v539 = vld [vmem:[#allocation5 + $0x798] sm:$0xff]
    %v540 = vld [vmem:[#allocation5 + $0x7a0] sm:$0xff]
    %v541 = vld [vmem:[#allocation5 + $0x7a8] sm:$0xff]
    %v542 = vld [vmem:[#allocation5 + $0x7b0] sm:$0xff]
    %v543 = vld [vmem:[#allocation5 + $0x7b8] sm:$0xff]
    %v544 = vld [vmem:[#allocation5 + $0x7c0] sm:$0xff]
    %v545 = vld [vmem:[#allocation5 + $0x7c8] sm:$0xff]
    %v546 = vld [vmem:[#allocation5 + $0x7d0] sm:$0xff]
    %v547 = vld [vmem:[#allocation5 + $0x7d8] sm:$0xff]
    %v548 = vld [vmem:[#allocation5 + $0x7e0] sm:$0xff]
    %v549 = vld [vmem:[#allocation5 + $0x7e8] sm:$0xff]
    %v550 = vld [vmem:[#allocation5 + $0x7f0] sm:$0xff]
    %v551 = vld [vmem:[#allocation5 + $0x7f8] sm:$0xff]
    %v552 = vadd.f32 %v40, %v296
    %v553 = vadd.f32 %v41, %v297
    %v554 = vadd.f32 %v42, %v298
    %v555 = vadd.f32 %v43, %v299
    %v556 = vadd.f32 %v44, %v300
    %v557 = vadd.f32 %v45, %v301
    %v558 = vadd.f32 %v46, %v302
    %v559 = vadd.f32 %v47, %v303
    %v560 = vadd.f32 %v48, %v304
    %v561 = vadd.f32 %v49, %v305
    %v562 = vadd.f32 %v50, %v306
    %v563 = vadd.f32 %v51, %v307
    %v564 = vadd.f32 %v52, %v308
    %v565 = vadd.f32 %v53, %v309
    %v566 = vadd.f32 %v54, %v310
    %v567 = vadd.f32 %v55, %v311
    %v568 = vadd.f32 %v56, %v312
    %v569 = vadd.f32 %v57, %v313
    %v570 = vadd.f32 %v58, %v314
    %v571 = vadd.f32 %v59, %v315
    %v572 = vadd.f32 %v60, %v316
    %v573 = vadd.f32 %v61, %v317
    %v574 = vadd.f32 %v62, %v318
    %v575 = vadd.f32 %v63, %v319
    %v576 = vadd.f32 %v64, %v320
    %v577 = vadd.f32 %v65, %v321
    %v578 = vadd.f32 %v66, %v322
    %v579 = vadd.f32 %v67, %v323
    %v580 = vadd.f32 %v68, %v324
    %v581 = vadd.f32 %v69, %v325
    %v582 = vadd.f32 %v70, %v326
    %v583 = vadd.f32 %v71, %v327
    %v584 = vadd.f32 %v72, %v328
    %v585 = vadd.f32 %v73, %v329
    %v586 = vadd.f32 %v74, %v330
    %v587 = vadd.f32 %v75, %v331
    %v588 = vadd.f32 %v76, %v332
    %v589 = vadd.f32 %v77, %v333
    %v590 = vadd.f32 %v78, %v334
    %v591 = vadd.f32 %v79, %v335
    %v592 = vadd.f32 %v80, %v336
    %v593 = vadd.f32 %v81, %v337
    %v594 = vadd.f32 %v82, %v338
    %v595 = vadd.f32 %v83, %v339
    %v596 = vadd.f32 %v84, %v340
    %v597 = vadd.f32 %v85, %v341
    %v598 = vadd.f32 %v86, %v342
    %v599 = vadd.f32 %v87, %v343
    %v600 = vadd.f32 %v88, %v344
    %v601 = vadd.f32 %v89, %v345
    %v602 = vadd.f32 %v90, %v346
    %v603 = vadd.f32 %v91, %v347
    %v604 = vadd.f32 %v92, %v348
    %v605 = vadd.f32 %v93, %v349
    %v606 = vadd.f32 %v94, %v350
    %v607 = vadd.f32 %v95, %v351
    %v608 = vadd.f32 %v96, %v352
    %v609 = vadd.f32 %v97, %v353
    %v610 = vadd.f32 %v98, %v354
    %v611 = vadd.f32 %v99, %v355
    %v612 = vadd.f32 %v100, %v356
    %v613 = vadd.f32 %v101, %v357
    %v614 = vadd.f32 %v102, %v358
    %v615 = vadd.f32 %v103, %v359
    %v616 = vadd.f32 %v104, %v360
    %v617 = vadd.f32 %v105, %v361
    %v618 = vadd.f32 %v106, %v362
    %v619 = vadd.f32 %v107, %v363
    %v620 = vadd.f32 %v108, %v364
    %v621 = vadd.f32 %v109, %v365
    %v622 = vadd.f32 %v110, %v366
    %v623 = vadd.f32 %v111, %v367
    %v624 = vadd.f32 %v112, %v368
    %v625 = vadd.f32 %v113, %v369
    %v626 = vadd.f32 %v114, %v370
    %v627 = vadd.f32 %v115, %v371
    %v628 = vadd.f32 %v116, %v372
    %v629 = vadd.f32 %v117, %v373
    %v630 = vadd.f32 %v118, %v374
    %v631 = vadd.f32 %v119, %v375
    %v632 = vadd.f32 %v120, %v376
    %v633 = vadd.f32 %v121, %v377
    %v634 = vadd.f32 %v122, %v378
    %v635 = vadd.f32 %v123, %v379
    %v636 = vadd.f32 %v124, %v380
    %v637 = vadd.f32 %v125, %v381
    %v638 = vadd.f32 %v126, %v382
    %v639 = vadd.f32 %v127, %v383
    %v640 = vadd.f32 %v128, %v384
    %v641 = vadd.f32 %v129, %v385
    %v642 = vadd.f32 %v130, %v386
    %v643 = vadd.f32 %v131, %v387
    %v644 = vadd.f32 %v132, %v388
    %v645 = vadd.f32 %v133, %v389
    %v646 = vadd.f32 %v134, %v390
    %v647 = vadd.f32 %v135, %v391
    %v648 = vadd.f32 %v136, %v392
    %v649 = vadd.f32 %v137, %v393
    %v650 = vadd.f32 %v138, %v394
    %v651 = vadd.f32 %v139, %v395
    %v652 = vadd.f32 %v140, %v396
    %v653 = vadd.f32 %v141, %v397
    %v654 = vadd.f32 %v142, %v398
    %v655 = vadd.f32 %v143, %v399
    %v656 = vadd.f32 %v144, %v400
    %v657 = vadd.f32 %v145, %v401
    %v658 = vadd.f32 %v146, %v402
    %v659 = vadd.f32 %v147, %v403
    %v660 = vadd.f32 %v148, %v404
    %v661 = vadd.f32 %v149, %v405
    %v662 = vadd.f32 %v150, %v406
    %v663 = vadd.f32 %v151, %v407
    %v664 = vadd.f32 %v152, %v408
    %v665 = vadd.f32 %v153, %v409
    %v666 = vadd.f32 %v154, %v410
    %v667 = vadd.f32 %v155, %v411
    %v668 = vadd.f32 %v156, %v412
    %v669 = vadd.f32 %v157, %v413
    %v670 = vadd.f32 %v158, %v414
    %v671 = vadd.f32 %v159, %v415
    %v672 = vadd.f32 %v160, %v416
    %v673 = vadd.f32 %v161, %v417
    %v674 = vadd.f32 %v162, %v418
    %v675 = vadd.f32 %v163, %v419
    %v676 = vadd.f32 %v164, %v420
    %v677 = vadd.f32 %v165, %v421
    %v678 = vadd.f32 %v166, %v422
    %v679 = vadd.f32 %v167, %v423
    %v680 = vadd.f32 %v168, %v424
    %v681 = vadd.f32 %v169, %v425
    %v682 = vadd.f32 %v170, %v426
    %v683 = vadd.f32 %v171, %v427
    %v684 = vadd.f32 %v172, %v428
    %v685 = vadd.f32 %v173, %v429
    %v686 = vadd.f32 %v174, %v430
    %v687 = vadd.f32 %v175, %v431
    %v688 = vadd.f32 %v176, %v432
    %v689 = vadd.f32 %v177, %v433
    %v690 = vadd.f32 %v178, %v434
    %v691 = vadd.f32 %v179, %v435
    %v692 = vadd.f32 %v180, %v436
    %v693 = vadd.f32 %v181, %v437
    %v694 = vadd.f32 %v182, %v438
    %v695 = vadd.f32 %v183, %v439
    %v696 = vadd.f32 %v184, %v440
    %v697 = vadd.f32 %v185, %v441
    %v698 = vadd.f32 %v186, %v442
    %v699 = vadd.f32 %v187, %v443
    %v700 = vadd.f32 %v188, %v444
    %v701 = vadd.f32 %v189, %v445
    %v702 = vadd.f32 %v190, %v446
    %v703 = vadd.f32 %v191, %v447
    %v704 = vadd.f32 %v192, %v448
    %v705 = vadd.f32 %v193, %v449
    %v706 = vadd.f32 %v194, %v450
    %v707 = vadd.f32 %v195, %v451
    %v708 = vadd.f32 %v196, %v452
    %v709 = vadd.f32 %v197, %v453
    %v710 = vadd.f32 %v198, %v454
    %v711 = vadd.f32 %v199, %v455
    %v712 = vadd.f32 %v200, %v456
    %v713 = vadd.f32 %v201, %v457
    %v714 = vadd.f32 %v202, %v458
    %v715 = vadd.f32 %v203, %v459
    %v716 = vadd.f32 %v204, %v460
    %v717 = vadd.f32 %v205, %v461
    %v718 = vadd.f32 %v206, %v462
    %v719 = vadd.f32 %v207, %v463
    %v720 = vadd.f32 %v208, %v464
    %v721 = vadd.f32 %v209, %v465
    %v722 = vadd.f32 %v210, %v466
    %v723 = vadd.f32 %v211, %v467
    %v724 = vadd.f32 %v212, %v468
    %v725 = vadd.f32 %v213, %v469
    %v726 = vadd.f32 %v214, %v470
    %v727 = vadd.f32 %v215, %v471
    %v728 = vadd.f32 %v216, %v472
    %v729 = vadd.f32 %v217, %v473
    %v730 = vadd.f32 %v218, %v474
    %v731 = vadd.f32 %v219, %v475
    %v732 = vadd.f32 %v220, %v476
    %v733 = vadd.f32 %v221, %v477
    %v734 = vadd.f32 %v222, %v478
    %v735 = vadd.f32 %v223, %v479
    %v736 = vadd.f32 %v224, %v480
    %v737 = vadd.f32 %v225, %v481
    %v738 = vadd.f32 %v226, %v482
    %v739 = vadd.f32 %v227, %v483
    %v740 = vadd.f32 %v228, %v484
    %v741 = vadd.f32 %v229, %v485
    %v742 = vadd.f32 %v230, %v486
    %v743 = vadd.f32 %v231, %v487
    %v744 = vadd.f32 %v232, %v488
    %v745 = vadd.f32 %v233, %v489
    %v746 = vadd.f32 %v234, %v490
    %v747 = vadd.f32 %v235, %v491
    %v748 = vadd.f32 %v236, %v492
    %v749 = vadd.f32 %v237, %v493
    %v750 = vadd.f32 %v238, %v494
    %v751 = vadd.f32 %v239, %v495
    %v752 = vadd.f32 %v240, %v496
    %v753 = vadd.f32 %v241, %v497
    %v754 = vadd.f32 %v242, %v498
    %v755 = vadd.f32 %v243, %v499
    %v756 = vadd.f32 %v244, %v500
    %v757 = vadd.f32 %v245, %v501
    %v758 = vadd.f32 %v246, %v502
    %v759 = vadd.f32 %v247, %v503
    %v760 = vadd.f32 %v248, %v504
    %v761 = vadd.f32 %v249, %v505
    %v762 = vadd.f32 %v250, %v506
    %v763 = vadd.f32 %v251, %v507
    %v764 = vadd.f32 %v252, %v508
    %v765 = vadd.f32 %v253, %v509
    %v766 = vadd.f32 %v254, %v510
    %v767 = vadd.f32 %v255, %v511
    %v768 = vadd.f32 %v256, %v512
    %v769 = vadd.f32 %v257, %v513
    %v770 = vadd.f32 %v258, %v514
    %v771 = vadd.f32 %v259, %v515
    %v772 = vadd.f32 %v260, %v516
    %v773 = vadd.f32 %v261, %v517
    %v774 = vadd.f32 %v262, %v518
    %v775 = vadd.f32 %v263, %v519
    %v776 = vadd.f32 %v264, %v520
    %v777 = vadd.f32 %v265, %v521
    %v778 = vadd.f32 %v266, %v522
    %v779 = vadd.f32 %v267, %v523
    %v780 = vadd.f32 %v268, %v524
    %v781 = vadd.f32 %v269, %v525
    %v782 = vadd.f32 %v270, %v526
    %v783 = vadd.f32 %v271, %v527
    %v784 = vadd.f32 %v272, %v528
    %v785 = vadd.f32 %v273, %v529
    %v786 = vadd.f32 %v274, %v530
    %v787 = vadd.f32 %v275, %v531
    %v788 = vadd.f32 %v276, %v532
    %v789 = vadd.f32 %v277, %v533
    %v790 = vadd.f32 %v278, %v534
    %v791 = vadd.f32 %v279, %v535
    %v792 = vadd.f32 %v280, %v536
    %v793 = vadd.f32 %v281, %v537
    %v794 = vadd.f32 %v282, %v538
    %v795 = vadd.f32 %v283, %v539
    %v796 = vadd.f32 %v284, %v540
    %v797 = vadd.f32 %v285, %v541
    %v798 = vadd.f32 %v286, %v542
    %v799 = vadd.f32 %v287, %v543
    %v800 = vadd.f32 %v288, %v544
    %v801 = vadd.f32 %v289, %v545
    %v802 = vadd.f32 %v290, %v546
    %v803 = vadd.f32 %v291, %v547
    %v804 = vadd.f32 %v292, %v548
    %v805 = vadd.f32 %v293, %v549
    %v806 = vadd.f32 %v294, %v550
    %v807 = vadd.f32 %v295, %v551
    %808 = vst [vmem:[#allocation7] sm:$0xff] %v552
    %809 = vst [vmem:[#allocation7 + $0x8] sm:$0xff] %v553
    %810 = vst [vmem:[#allocation7 + $0x10] sm:$0xff] %v554
    %811 = vst [vmem:[#allocation7 + $0x18] sm:$0xff] %v555
    %812 = vst [vmem:[#allocation7 + $0x20] sm:$0xff] %v556
    %813 = vst [vmem:[#allocation7 + $0x28] sm:$0xff] %v557
    %814 = vst [vmem:[#allocation7 + $0x30] sm:$0xff] %v558
    %815 = vst [vmem:[#allocation7 + $0x38] sm:$0xff] %v559
    %816 = vst [vmem:[#allocation7 + $0x40] sm:$0xff] %v560
    %817 = vst [vmem:[#allocation7 + $0x48] sm:$0xff] %v561
    %818 = vst [vmem:[#allocation7 + $0x50] sm:$0xff] %v562
    %819 = vst [vmem:[#allocation7 + $0x58] sm:$0xff] %v563
    %820 = vst [vmem:[#allocation7 + $0x60] sm:$0xff] %v564
    %821 = vst [vmem:[#allocation7 + $0x68] sm:$0xff] %v565
    %822 = vst [vmem:[#allocation7 + $0x70] sm:$0xff] %v566
    %823 = vst [vmem:[#allocation7 + $0x78] sm:$0xff] %v567
    %824 = vst [vmem:[#allocation7 + $0x80] sm:$0xff] %v568
    %825 = vst [vmem:[#allocation7 + $0x88] sm:$0xff] %v569
    %826 = vst [vmem:[#allocation7 + $0x90] sm:$0xff] %v570
    %827 = vst [vmem:[#allocation7 + $0x98] sm:$0xff] %v571
    %828 = vst [vmem:[#allocation7 + $0xa0] sm:$0xff] %v572
    %829 = vst [vmem:[#allocation7 + $0xa8] sm:$0xff] %v573
    %830 = vst [vmem:[#allocation7 + $0xb0] sm:$0xff] %v574
    %831 = vst [vmem:[#allocation7 + $0xb8] sm:$0xff] %v575
    %832 = vst [vmem:[#allocation7 + $0xc0] sm:$0xff] %v576
    %833 = vst [vmem:[#allocation7 + $0xc8] sm:$0xff] %v577
    %834 = vst [vmem:[#allocation7 + $0xd0] sm:$0xff] %v578
    %835 = vst [vmem:[#allocation7 + $0xd8] sm:$0xff] %v579
    %836 = vst [vmem:[#allocation7 + $0xe0] sm:$0xff] %v580
    %837 = vst [vmem:[#allocation7 + $0xe8] sm:$0xff] %v581
    %838 = vst [vmem:[#allocation7 + $0xf0] sm:$0xff] %v582
    %839 = vst [vmem:[#allocation7 + $0xf8] sm:$0xff] %v583
    %840 = vst [vmem:[#allocation7 + $0x100] sm:$0xff] %v584
    %841 = vst [vmem:[#allocation7 + $0x108] sm:$0xff] %v585
    %842 = vst [vmem:[#allocation7 + $0x110] sm:$0xff] %v586
    %843 = vst [vmem:[#allocation7 + $0x118] sm:$0xff] %v587
    %844 = vst [vmem:[#allocation7 + $0x120] sm:$0xff] %v588
    %845 = vst [vmem:[#allocation7 + $0x128] sm:$0xff] %v589
    %846 = vst [vmem:[#allocation7 + $0x130] sm:$0xff] %v590
    %847 = vst [vmem:[#allocation7 + $0x138] sm:$0xff] %v591
    %848 = vst [vmem:[#allocation7 + $0x140] sm:$0xff] %v592
    %849 = vst [vmem:[#allocation7 + $0x148] sm:$0xff] %v593
    %850 = vst [vmem:[#allocation7 + $0x150] sm:$0xff] %v594
    %851 = vst [vmem:[#allocation7 + $0x158] sm:$0xff] %v595
    %852 = vst [vmem:[#allocation7 + $0x160] sm:$0xff] %v596
    %853 = vst [vmem:[#allocation7 + $0x168] sm:$0xff] %v597
    %854 = vst [vmem:[#allocation7 + $0x170] sm:$0xff] %v598
    %855 = vst [vmem:[#allocation7 + $0x178] sm:$0xff] %v599
    %856 = vst [vmem:[#allocation7 + $0x180] sm:$0xff] %v600
    %857 = vst [vmem:[#allocation7 + $0x188] sm:$0xff] %v601
    %858 = vst [vmem:[#allocation7 + $0x190] sm:$0xff] %v602
    %859 = vst [vmem:[#allocation7 + $0x198] sm:$0xff] %v603
    %860 = vst [vmem:[#allocation7 + $0x1a0] sm:$0xff] %v604
    %861 = vst [vmem:[#allocation7 + $0x1a8] sm:$0xff] %v605
    %862 = vst [vmem:[#allocation7 + $0x1b0] sm:$0xff] %v606
    %863 = vst [vmem:[#allocation7 + $0x1b8] sm:$0xff] %v607
    %864 = vst [vmem:[#allocation7 + $0x1c0] sm:$0xff] %v608
    %865 = vst [vmem:[#allocation7 + $0x1c8] sm:$0xff] %v609
    %866 = vst [vmem:[#allocation7 + $0x1d0] sm:$0xff] %v610
    %867 = vst [vmem:[#allocation7 + $0x1d8] sm:$0xff] %v611
    %868 = vst [vmem:[#allocation7 + $0x1e0] sm:$0xff] %v612
    %869 = vst [vmem:[#allocation7 + $0x1e8] sm:$0xff] %v613
    %870 = vst [vmem:[#allocation7 + $0x1f0] sm:$0xff] %v614
    %871 = vst [vmem:[#allocation7 + $0x1f8] sm:$0xff] %v615
    %872 = vst [vmem:[#allocation7 + $0x200] sm:$0xff] %v616
    %873 = vst [vmem:[#allocation7 + $0x208] sm:$0xff] %v617
    %874 = vst [vmem:[#allocation7 + $0x210] sm:$0xff] %v618
    %875 = vst [vmem:[#allocation7 + $0x218] sm:$0xff] %v619
    %876 = vst [vmem:[#allocation7 + $0x220] sm:$0xff] %v620
    %877 = vst [vmem:[#allocation7 + $0x228] sm:$0xff] %v621
    %878 = vst [vmem:[#allocation7 + $0x230] sm:$0xff] %v622
    %879 = vst [vmem:[#allocation7 + $0x238] sm:$0xff] %v623
    %880 = vst [vmem:[#allocation7 + $0x240] sm:$0xff] %v624
    %881 = vst [vmem:[#allocation7 + $0x248] sm:$0xff] %v625
    %882 = vst [vmem:[#allocation7 + $0x250] sm:$0xff] %v626
    %883 = vst [vmem:[#allocation7 + $0x258] sm:$0xff] %v627
    %884 = vst [vmem:[#allocation7 + $0x260] sm:$0xff] %v628
    %885 = vst [vmem:[#allocation7 + $0x268] sm:$0xff] %v629
    %886 = vst [vmem:[#allocation7 + $0x270] sm:$0xff] %v630
    %887 = vst [vmem:[#allocation7 + $0x278] sm:$0xff] %v631
    %888 = vst [vmem:[#allocation7 + $0x280] sm:$0xff] %v632
    %889 = vst [vmem:[#allocation7 + $0x288] sm:$0xff] %v633
    %890 = vst [vmem:[#allocation7 + $0x290] sm:$0xff] %v634
    %891 = vst [vmem:[#allocation7 + $0x298] sm:$0xff] %v635
    %892 = vst [vmem:[#allocation7 + $0x2a0] sm:$0xff] %v636
    %893 = vst [vmem:[#allocation7 + $0x2a8] sm:$0xff] %v637
    %894 = vst [vmem:[#allocation7 + $0x2b0] sm:$0xff] %v638
    %895 = vst [vmem:[#allocation7 + $0x2b8] sm:$0xff] %v639
    %896 = vst [vmem:[#allocation7 + $0x2c0] sm:$0xff] %v640
    %897 = vst [vmem:[#allocation7 + $0x2c8] sm:$0xff] %v641
    %898 = vst [vmem:[#allocation7 + $0x2d0] sm:$0xff] %v642
    %899 = vst [vmem:[#allocation7 + $0x2d8] sm:$0xff] %v643
    %900 = vst [vmem:[#allocation7 + $0x2e0] sm:$0xff] %v644
    %901 = vst [vmem:[#allocation7 + $0x2e8] sm:$0xff] %v645
    %902 = vst [vmem:[#allocation7 + $0x2f0] sm:$0xff] %v646
    %903 = vst [vmem:[#allocation7 + $0x2f8] sm:$0xff] %v647
    %904 = vst [vmem:[#allocation7 + $0x300] sm:$0xff] %v648
    %905 = vst [vmem:[#allocation7 + $0x308] sm:$0xff] %v649
    %906 = vst [vmem:[#allocation7 + $0x310] sm:$0xff] %v650
    %907 = vst [vmem:[#allocation7 + $0x318] sm:$0xff] %v651
    %908 = vst [vmem:[#allocation7 + $0x320] sm:$0xff] %v652
    %909 = vst [vmem:[#allocation7 + $0x328] sm:$0xff] %v653
    %910 = vst [vmem:[#allocation7 + $0x330] sm:$0xff] %v654
    %911 = vst [vmem:[#allocation7 + $0x338] sm:$0xff] %v655
    %912 = vst [vmem:[#allocation7 + $0x340] sm:$0xff] %v656
    %913 = vst [vmem:[#allocation7 + $0x348] sm:$0xff] %v657
    %914 = vst [vmem:[#allocation7 + $0x350] sm:$0xff] %v658
    %915 = vst [vmem:[#allocation7 + $0x358] sm:$0xff] %v659
    %916 = vst [vmem:[#allocation7 + $0x360] sm:$0xff] %v660
    %917 = vst [vmem:[#allocation7 + $0x368] sm:$0xff] %v661
    %918 = vst [vmem:[#allocation7 + $0x370] sm:$0xff] %v662
    %919 = vst [vmem:[#allocation7 + $0x378] sm:$0xff] %v663
    %920 = vst [vmem:[#allocation7 + $0x380] sm:$0xff] %v664
    %921 = vst [vmem:[#allocation7 + $0x388] sm:$0xff] %v665
    %922 = vst [vmem:[#allocation7 + $0x390] sm:$0xff] %v666
    %923 = vst [vmem:[#allocation7 + $0x398] sm:$0xff] %v667
    %924 = vst [vmem:[#allocation7 + $0x3a0] sm:$0xff] %v668
    %925 = vst [vmem:[#allocation7 + $0x3a8] sm:$0xff] %v669
    %926 = vst [vmem:[#allocation7 + $0x3b0] sm:$0xff] %v670
    %927 = vst [vmem:[#allocation7 + $0x3b8] sm:$0xff] %v671
    %928 = vst [vmem:[#allocation7 + $0x3c0] sm:$0xff] %v672
    %929 = vst [vmem:[#allocation7 + $0x3c8] sm:$0xff] %v673
    %930 = vst [vmem:[#allocation7 + $0x3d0] sm:$0xff] %v674
    %931 = vst [vmem:[#allocation7 + $0x3d8] sm:$0xff] %v675
    %932 = vst [vmem:[#allocation7 + $0x3e0] sm:$0xff] %v676
    %933 = vst [vmem:[#allocation7 + $0x3e8] sm:$0xff] %v677
    %934 = vst [vmem:[#allocation7 + $0x3f0] sm:$0xff] %v678
    %935 = vst [vmem:[#allocation7 + $0x3f8] sm:$0xff] %v679
    %936 = vst [vmem:[#allocation7 + $0x400] sm:$0xff] %v680
    %937 = vst [vmem:[#allocation7 + $0x408] sm:$0xff] %v681
    %938 = vst [vmem:[#allocation7 + $0x410] sm:$0xff] %v682
    %939 = vst [vmem:[#allocation7 + $0x418] sm:$0xff] %v683
    %940 = vst [vmem:[#allocation7 + $0x420] sm:$0xff] %v684
    %941 = vst [vmem:[#allocation7 + $0x428] sm:$0xff] %v685
    %942 = vst [vmem:[#allocation7 + $0x430] sm:$0xff] %v686
    %943 = vst [vmem:[#allocation7 + $0x438] sm:$0xff] %v687
    %944 = vst [vmem:[#allocation7 + $0x440] sm:$0xff] %v688
    %945 = vst [vmem:[#allocation7 + $0x448] sm:$0xff] %v689
    %946 = vst [vmem:[#allocation7 + $0x450] sm:$0xff] %v690
    %947 = vst [vmem:[#allocation7 + $0x458] sm:$0xff] %v691
    %948 = vst [vmem:[#allocation7 + $0x460] sm:$0xff] %v692
    %949 = vst [vmem:[#allocation7 + $0x468] sm:$0xff] %v693
    %950 = vst [vmem:[#allocation7 + $0x470] sm:$0xff] %v694
    %951 = vst [vmem:[#allocation7 + $0x478] sm:$0xff] %v695
    %952 = vst [vmem:[#allocation7 + $0x480] sm:$0xff] %v696
    %953 = vst [vmem:[#allocation7 + $0x488] sm:$0xff] %v697
    %954 = vst [vmem:[#allocation7 + $0x490] sm:$0xff] %v698
    %955 = vst [vmem:[#allocation7 + $0x498] sm:$0xff] %v699
    %956 = vst [vmem:[#allocation7 + $0x4a0] sm:$0xff] %v700
    %957 = vst [vmem:[#allocation7 + $0x4a8] sm:$0xff] %v701
    %958 = vst [vmem:[#allocation7 + $0x4b0] sm:$0xff] %v702
    %959 = vst [vmem:[#allocation7 + $0x4b8] sm:$0xff] %v703
    %960 = vst [vmem:[#allocation7 + $0x4c0] sm:$0xff] %v704
    %961 = vst [vmem:[#allocation7 + $0x4c8] sm:$0xff] %v705
    %962 = vst [vmem:[#allocation7 + $0x4d0] sm:$0xff] %v706
    %963 = vst [vmem:[#allocation7 + $0x4d8] sm:$0xff] %v707
    %964 = vst [vmem:[#allocation7 + $0x4e0] sm:$0xff] %v708
    %965 = vst [vmem:[#allocation7 + $0x4e8] sm:$0xff] %v709
    %966 = vst [vmem:[#allocation7 + $0x4f0] sm:$0xff] %v710
    %967 = vst [vmem:[#allocation7 + $0x4f8] sm:$0xff] %v711
    %968 = vst [vmem:[#allocation7 + $0x500] sm:$0xff] %v712
    %969 = vst [vmem:[#allocation7 + $0x508] sm:$0xff] %v713
    %970 = vst [vmem:[#allocation7 + $0x510] sm:$0xff] %v714
    %971 = vst [vmem:[#allocation7 + $0x518] sm:$0xff] %v715
    %972 = vst [vmem:[#allocation7 + $0x520] sm:$0xff] %v716
    %973 = vst [vmem:[#allocation7 + $0x528] sm:$0xff] %v717
    %974 = vst [vmem:[#allocation7 + $0x530] sm:$0xff] %v718
    %975 = vst [vmem:[#allocation7 + $0x538] sm:$0xff] %v719
    %976 = vst [vmem:[#allocation7 + $0x540] sm:$0xff] %v720
    %977 = vst [vmem:[#allocation7 + $0x548] sm:$0xff] %v721
    %978 = vst [vmem:[#allocation7 + $0x550] sm:$0xff] %v722
    %979 = vst [vmem:[#allocation7 + $0x558] sm:$0xff] %v723
    %980 = vst [vmem:[#allocation7 + $0x560] sm:$0xff] %v724
    %981 = vst [vmem:[#allocation7 + $0x568] sm:$0xff] %v725
    %982 = vst [vmem:[#allocation7 + $0x570] sm:$0xff] %v726
    %983 = vst [vmem:[#allocation7 + $0x578] sm:$0xff] %v727
    %984 = vst [vmem:[#allocation7 + $0x580] sm:$0xff] %v728
    %985 = vst [vmem:[#allocation7 + $0x588] sm:$0xff] %v729
    %986 = vst [vmem:[#allocation7 + $0x590] sm:$0xff] %v730
    %987 = vst [vmem:[#allocation7 + $0x598] sm:$0xff] %v731
    %988 = vst [vmem:[#allocation7 + $0x5a0] sm:$0xff] %v732
    %989 = vst [vmem:[#allocation7 + $0x5a8] sm:$0xff] %v733
    %990 = vst [vmem:[#allocation7 + $0x5b0] sm:$0xff] %v734
    %991 = vst [vmem:[#allocation7 + $0x5b8] sm:$0xff] %v735
    %992 = vst [vmem:[#allocation7 + $0x5c0] sm:$0xff] %v736
    %993 = vst [vmem:[#allocation7 + $0x5c8] sm:$0xff] %v737
    %994 = vst [vmem:[#allocation7 + $0x5d0] sm:$0xff] %v738
    %995 = vst [vmem:[#allocation7 + $0x5d8] sm:$0xff] %v739
    %996 = vst [vmem:[#allocation7 + $0x5e0] sm:$0xff] %v740
    %997 = vst [vmem:[#allocation7 + $0x5e8] sm:$0xff] %v741
    %998 = vst [vmem:[#allocation7 + $0x5f0] sm:$0xff] %v742
    %999 = vst [vmem:[#allocation7 + $0x5f8] sm:$0xff] %v743
    %1000 = vst [vmem:[#allocation7 + $0x600] sm:$0xff] %v744
    %1001 = vst [vmem:[#allocation7 + $0x608] sm:$0xff] %v745
    %1002 = vst [vmem:[#allocation7 + $0x610] sm:$0xff] %v746
    %1003 = vst [vmem:[#allocation7 + $0x618] sm:$0xff] %v747
    %1004 = vst [vmem:[#allocation7 + $0x620] sm:$0xff] %v748
    %1005 = vst [vmem:[#allocation7 + $0x628] sm:$0xff] %v749
    %1006 = vst [vmem:[#allocation7 + $0x630] sm:$0xff] %v750
    %1007 = vst [vmem:[#allocation7 + $0x638] sm:$0xff] %v751
    %1008 = vst [vmem:[#allocation7 + $0x640] sm:$0xff] %v752
    %1009 = vst [vmem:[#allocation7 + $0x648] sm:$0xff] %v753
    %1010 = vst [vmem:[#allocation7 + $0x650] sm:$0xff] %v754
    %1011 = vst [vmem:[#allocation7 + $0x658] sm:$0xff] %v755
    %1012 = vst [vmem:[#allocation7 + $0x660] sm:$0xff] %v756
    %1013 = vst [vmem:[#allocation7 + $0x668] sm:$0xff] %v757
    %1014 = vst [vmem:[#allocation7 + $0x670] sm:$0xff] %v758
    %1015 = vst [vmem:[#allocation7 + $0x678] sm:$0xff] %v759
    %1016 = vst [vmem:[#allocation7 + $0x680] sm:$0xff] %v760
    %1017 = vst [vmem:[#allocation7 + $0x688] sm:$0xff] %v761
    %1018 = vst [vmem:[#allocation7 + $0x690] sm:$0xff] %v762
    %1019 = vst [vmem:[#allocation7 + $0x698] sm:$0xff] %v763
    %1020 = vst [vmem:[#allocation7 + $0x6a0] sm:$0xff] %v764
    %1021 = vst [vmem:[#allocation7 + $0x6a8] sm:$0xff] %v765
    %1022 = vst [vmem:[#allocation7 + $0x6b0] sm:$0xff] %v766
    %1023 = vst [vmem:[#allocation7 + $0x6b8] sm:$0xff] %v767
    %1024 = vst [vmem:[#allocation7 + $0x6c0] sm:$0xff] %v768
    %1025 = vst [vmem:[#allocation7 + $0x6c8] sm:$0xff] %v769
    %1026 = vst [vmem:[#allocation7 + $0x6d0] sm:$0xff] %v770
    %1027 = vst [vmem:[#allocation7 + $0x6d8] sm:$0xff] %v771
    %1028 = vst [vmem:[#allocation7 + $0x6e0] sm:$0xff] %v772
    %1029 = vst [vmem:[#allocation7 + $0x6e8] sm:$0xff] %v773
    %1030 = vst [vmem:[#allocation7 + $0x6f0] sm:$0xff] %v774
    %1031 = vst [vmem:[#allocation7 + $0x6f8] sm:$0xff] %v775
    %1032 = vst [vmem:[#allocation7 + $0x700] sm:$0xff] %v776
    %1033 = vst [vmem:[#allocation7 + $0x708] sm:$0xff] %v777
    %1034 = vst [vmem:[#allocation7 + $0x710] sm:$0xff] %v778
    %1035 = vst [vmem:[#allocation7 + $0x718] sm:$0xff] %v779
    %1036 = vst [vmem:[#allocation7 + $0x720] sm:$0xff] %v780
    %1037 = vst [vmem:[#allocation7 + $0x728] sm:$0xff] %v781
    %1038 = vst [vmem:[#allocation7 + $0x730] sm:$0xff] %v782
    %1039 = vst [vmem:[#allocation7 + $0x738] sm:$0xff] %v783
    %1040 = vst [vmem:[#allocation7 + $0x740] sm:$0xff] %v784
    %1041 = vst [vmem:[#allocation7 + $0x748] sm:$0xff] %v785
    %1042 = vst [vmem:[#allocation7 + $0x750] sm:$0xff] %v786
    %1043 = vst [vmem:[#allocation7 + $0x758] sm:$0xff] %v787
    %1044 = vst [vmem:[#allocation7 + $0x760] sm:$0xff] %v788
    %1045 = vst [vmem:[#allocation7 + $0x768] sm:$0xff] %v789
    %1046 = vst [vmem:[#allocation7 + $0x770] sm:$0xff] %v790
    %1047 = vst [vmem:[#allocation7 + $0x778] sm:$0xff] %v791
    %1048 = vst [vmem:[#allocation7 + $0x780] sm:$0xff] %v792
    %1049 = vst [vmem:[#allocation7 + $0x788] sm:$0xff] %v793
    %1050 = vst [vmem:[#allocation7 + $0x790] sm:$0xff] %v794
    %1051 = vst [vmem:[#allocation7 + $0x798] sm:$0xff] %v795
    %1052 = vst [vmem:[#allocation7 + $0x7a0] sm:$0xff] %v796
    %1053 = vst [vmem:[#allocation7 + $0x7a8] sm:$0xff] %v797
    %1054 = vst [vmem:[#allocation7 + $0x7b0] sm:$0xff] %v798
    %1055 = vst [vmem:[#allocation7 + $0x7b8] sm:$0xff] %v799
    %1056 = vst [vmem:[#allocation7 + $0x7c0] sm:$0xff] %v800
    %1057 = vst [vmem:[#allocation7 + $0x7c8] sm:$0xff] %v801
    %1058 = vst [vmem:[#allocation7 + $0x7d0] sm:$0xff] %v802
    %1059 = vst [vmem:[#allocation7 + $0x7d8] sm:$0xff] %v803
    %1060 = vst [vmem:[#allocation7 + $0x7e0] sm:$0xff] %v804
    %1061 = vst [vmem:[#allocation7 + $0x7e8] sm:$0xff] %v805
    %1062 = vst [vmem:[#allocation7 + $0x7f0] sm:$0xff] %v806
    %1063 = vst [vmem:[#allocation7 + $0x7f8] sm:$0xff] %v807
    // Predicated region
    $region18: #{tpu_custom_call.1} parent=1 // pred_check
      _
    $region19: #{tpu_custom_call.1} parent=1 // pred_check_branch
      %1065 = sbr.rel (0) target = $region21
    $region20: #{tpu_custom_call.1} parent=1 // pred_region
      %s1067 = ssub.s32 32768, 32768
      %1068 = vsyncadd [#allocation4], %s1067
      %s1069 = sshll.u32 [#allocation7], 4
      %s1070 = int_to_ptr.vmem [resolvable:$true] %s1069
      %1075 = dma.vmem_to_hbm [thread:$0]  %s1070, 32768, %s2, [#allocation4], 128, 128, 8
    $region21: #{tpu_custom_call.1} parent=1 // pred_fallthru
      _
    // Predicated region
    $region22: #{tpu_custom_call.1} parent=1 // pred_check
      _
    $region23: #{tpu_custom_call.1} parent=1 // pred_check_branch
      %1077 = sbr.rel (0) target = $region25
    $region24: #{tpu_custom_call.1} parent=1 // pred_region
      %1078 = dma.done [#allocation4], 32768
    $region25: #{tpu_custom_call.1} parent=1 // pred_fallthru
      _
    %1079 = vsyncpa [#allocation3], 1
    %1080 = vsyncpa [#allocation6], 1
    %1081 = vsyncpa [#allocation4], 1

</llo_original>
